<compile_context>
chip_gen: v7x
topology: tpu7x:2x2x1
jax: 0.10.0
libtpu: 0.0.40
codegen_flags: <defaults>
</compile_context>

<pallas_src>
import jax
import jax.numpy as jnp
import numpy as np
from jax.experimental import pallas as pl
from jax.experimental.pallas import tpu as pltpu


# ---------------------------------------------------------------------------
# Kernel: one grid step = one row slab over (B*P); all domains fused via
# block-diagonal weights, so the body is two lane-dense GEMMs + two stores.
# ---------------------------------------------------------------------------
def _mcae_kernel(x_ref, we_ref, be_ref, wd_ref, bd_ref, z_ref, xhat_ref):
    """Block shapes:
      x_ref    : (tbp, D*F)   activations (f32 or bf16)
      we_ref   : (D*F, D*L)   block-diagonal encoder weights (x @ we == per-domain x @ We.T)
      be_ref   : (1, D*L)     encoder bias (f32)
      wd_ref   : (D*L, D*F)   block-diagonal decoder weights
      bd_ref   : (1, D*F)     decoder bias (f32)
      z_ref    : (tbp, D*L)
      xhat_ref : (tbp, D*F)
    """
    x = x_ref[...]
    z = jnp.dot(x, we_ref[...], preferred_element_type=jnp.float32)
    z = z + be_ref[...]                                   # f32 accum + f32 bias
    xh = jnp.dot(z.astype(wd_ref.dtype), wd_ref[...],
                 preferred_element_type=jnp.float32)
    xh = xh + bd_ref[...]
    z_ref[...] = z.astype(z_ref.dtype)                    # single wide store
    xhat_ref[...] = xh.astype(xhat_ref.dtype)             # single wide store


# ---------------------------------------------------------------------------
# Tiling / pallas_call wrapper
# ---------------------------------------------------------------------------
def _round_up(v, m):
    return ((v + m - 1) // m) * m


def _round_down(v, m):
    return (v // m) * m


def _vmem_budgets():
    """Generation-aware VMEM budgets (v5e/v6e: 128 MiB, v7x: 64 MiB per TC)."""
    try:
        cap = int(pltpu.get_tpu_info().vmem_capacity_bytes)
    except Exception:
        cap = 64 * 1024 * 1024          # conservative (v7x-sized) fallback
    block_budget = min(int(cap * 0.40), 56 * 1024 * 1024)   # for tile sizing
    vmem_limit = min(int(cap * 0.70), 100 * 1024 * 1024)    # compiler limit
    return block_budget, vmem_limit


def _pick_row_tile(bp, df, dl, itemsize, block_budget, fixed_bytes):
    """Row tile over (B*P) sized from the real padded lane widths so the
    double-buffered x / z / x_hat blocks (plus the resident weights) fit the
    generation-aware VMEM budget.  Also guarantees >=2 grid steps when BP is
    large enough so v7x's two TensorCores both get work."""
    lane_df = _round_up(df, 128)
    lane_dl = _round_up(dl, 128)
    row_bytes = (2 * lane_df + lane_dl) * itemsize          # x + x_hat + z per row
    avail = max(block_budget - fixed_bytes, 1 << 20)
    tbp = avail // (2 * row_bytes)                          # x2: double buffering
    tbp = int(min(bp, 2048, max(8, tbp)))
    # Keep at least 2 grid steps so the 'parallel' row axis can split across
    # two TensorCores on v7x (harmless ~0.35 us extra step on 1-TC chips).
    if tbp >= bp and bp >= 16:
        tbp = _round_up(pl.cdiv(bp, 2), 8)
    if tbp < bp:
        tbp = _round_down(tbp, 256) if tbp >= 256 else max(8, _round_down(tbp, 8))
    return min(tbp, bp)


def _mcae_pallas(x_flat, we_bd, be_row, wd_bd, bd_row):
    """x_flat: (BP, D*F). we_bd: (D*F, D*L). be_row: (1, D*L).
    wd_bd: (D*L, D*F). bd_row: (1, D*F)."""
    bp, df = x_flat.shape
    dl = we_bd.shape[-1]
    itemsize = x_flat.dtype.itemsize
    w_itemsize = we_bd.dtype.itemsize

    block_budget, vmem_limit = _vmem_budgets()
    # Weight/bias blocks are VMEM-resident (constant index_map); account for
    # them (double-buffered by default) when sizing the activation tile.
    fixed_bytes = 2 * (
        _round_up(df, 8) * _round_up(dl, 128) * w_itemsize
        + _round_up(dl, 8) * _round_up(df, 128) * w_itemsize
        + 8 * (_round_up(dl, 128) + _round_up(df, 128)) * 4)
    tbp = _pick_row_tile(bp, df, dl, itemsize, block_budget, fixed_bytes)
    grid = (pl.cdiv(bp, tbp),)

    # Advisory cost hint for XLA scheduling around the custom call.
    cost = pl.CostEstimate(
        flops=4 * bp * df * dl,                               # 2 GEMMs (incl. zero blocks)
        transcendentals=0,
        bytes_accessed=(bp * (2 * df + dl) * itemsize         # x + x_hat + z
                        + 2 * df * dl * w_itemsize            # We_bd + Wd_bd
                        + (df + dl) * 4),                     # biases
    )

    z, xhat = pl.pallas_call(
        _mcae_kernel,
        out_shape=(
            jax.ShapeDtypeStruct((bp, dl), x_flat.dtype),
            jax.ShapeDtypeStruct((bp, df), x_flat.dtype),
        ),
        grid=grid,
        in_specs=[
            pl.BlockSpec((tbp, df), lambda i: (i, 0)),
            # Constant index_map -> weights/biases DMA'd once, VMEM-resident.
            pl.BlockSpec((df, dl), lambda i: (0, 0)),
            pl.BlockSpec((1, dl), lambda i: (0, 0)),
            pl.BlockSpec((dl, df), lambda i: (0, 0)),
            pl.BlockSpec((1, df), lambda i: (0, 0)),
        ],
        out_specs=(
            pl.BlockSpec((tbp, dl), lambda i: (i, 0)),
            pl.BlockSpec((tbp, df), lambda i: (i, 0)),
        ),
        compiler_params=pltpu.CompilerParams(
            dimension_semantics=("parallel",),   # row axis -> megacore split on v7x
            vmem_limit_bytes=vmem_limit,
        ),
        cost_estimate=cost,
    )(x_flat, we_bd, be_row, wd_bd, bd_row)
    return z, xhat


@jax.jit
def _forward_impl(x6, we_bd, be_row, wd_bd, bd_row):
    """x6: (B, P, D, C, W, H). All reshapes here are free views (no transpose)."""
    b, p, d, c, w, h = x6.shape
    f = c * w * h
    dl = we_bd.shape[-1]
    l = dl // d
    x_flat = x6.reshape(b * p, d * f)                 # view, no data movement
    z_flat, xhat_flat = _mcae_pallas(x_flat, we_bd, be_row, wd_bd, bd_row)
    z = z_flat.reshape(b, p, d, l)                    # view
    x_hat = xhat_flat.reshape(b, p, d, c, w, h)       # view
    return z, x_hat


# ---------------------------------------------------------------------------
# Parameter handling (routing gather + block-diagonal assembly hoisted out of
# the hot path — call prepare_routed_params once per (params, index) change).
# ---------------------------------------------------------------------------
def init_params(num_channels, in_features, latent_size, key):
    """Per-autoencoder Linear params (PyTorch Linear layout: W[out, in])."""
    keys = jax.random.split(key, 4)
    bound_e = 1.0 / np.sqrt(in_features)
    bound_d = 1.0 / np.sqrt(latent_size)
    We = jax.random.uniform(keys[0], (num_channels, latent_size, in_features),
                            jnp.float32, -bound_e, bound_e)
    be = jax.random.uniform(keys[1], (num_channels, latent_size),
                            jnp.float32, -bound_e, bound_e)
    Wd = jax.random.uniform(keys[2], (num_channels, in_features, latent_size),
                            jnp.float32, -bound_d, bound_d)
    bd = jax.random.uniform(keys[3], (num_channels, in_features),
                            jnp.float32, -bound_d, bound_d)
    return We, be, Wd, bd


def _block_diag(blocks):
    """Assemble a block-diagonal matrix from equal-shaped 2-D blocks.
    Runs once per (params, index) — not on the forward hot path."""
    n = len(blocks)
    r, c = blocks[0].shape
    out = jnp.zeros((n * r, n * c), dtype=blocks[0].dtype)
    for d, blk in enumerate(blocks):
        out = out.at[d * r:(d + 1) * r, d * c:(d + 1) * c].set(blk)
    return out


def prepare_routed_params(params, n_domains, index=None, compute_dtype=None):
    """Gather params with the routing `index` and fuse them into block-diagonal
    kernel layout.  For the bandwidth-optimal fast path pass
    compute_dtype=jnp.bfloat16 (and feed bf16 activations); accumulation and
    biases stay f32 inside the kernel."""
    We, be, Wd, bd = params
    n_ae = We.shape[0]
    if index is None:
        if n_domains != n_ae:
            raise ValueError(f"n_domains ({n_domains}) != n_autoencoders ({n_ae})")
        index = jnp.arange(n_domains, dtype=jnp.int32)
    else:
        index = jnp.asarray(index, dtype=jnp.int32)
        if index.shape[0] != n_domains:
            raise ValueError(f"len(index) ({index.shape[0]}) != n_domains ({n_domains})")
    we_g = We[index]                                 # (D, L, F)
    wd_g = Wd[index]                                 # (D, F, L)
    be_g = be[index]                                 # (D, L)
    bd_g = bd[index]                                 # (D, F)
    D = n_domains
    L = We.shape[1]
    F = We.shape[2]
    we_bd = _block_diag([we_g[d].T for d in range(D)])   # (D*F, D*L): x @ we == x @ We.T
    wd_bd = _block_diag([wd_g[d].T for d in range(D)])   # (D*L, D*F)
    be_row = be_g.reshape(1, D * L).astype(jnp.float32)
    bd_row = bd_g.reshape(1, D * F).astype(jnp.float32)
    if compute_dtype is not None:
        we_bd = we_bd.astype(compute_dtype)
        wd_bd = wd_bd.astype(compute_dtype)
    return we_bd, be_row, wd_bd, bd_row


def mcae_forward(x, routed_params):
    """Hot-path forward with pre-routed params.  x: (B,P,D,C,W,H) or (B,P,C,W,H).
    Returns (z[B,P,D,L], x_hat[B,P,D,C,W,H])."""
    if x.ndim == 5:
        x = x[:, :, None, :, :, :]
    we_bd, be_row, wd_bd, bd_row = routed_params
    return _forward_impl(x, we_bd, be_row, wd_bd, bd_row)


def multi_channel_autoencoder_forward(x, params, index=None):
    """Convenience wrapper matching MultiChannelAutoEncoderLinear.forward."""
    if x.ndim == 5:
        x = x[:, :, None, :, :, :]
    routed = prepare_routed_params(params, x.shape[2], index=index)
    return mcae_forward(x, routed)


# TODO(synk): calculate_loss (MSE + activation-magnitude + variance terms) is a
# training-time reduction, not part of forward(); implement separately if needed.


# ---------------------------------------------------------------------------
# Pure-JAX reference for correctness checks
# ---------------------------------------------------------------------------
def _reference_forward(x, params, index=None):
    if x.ndim == 5:
        x = x[:, :, None, :, :, :]
    B, P, D, C, W, H = x.shape
    We, be, Wd, bd = params
    if index is None:
        index = jnp.arange(D, dtype=jnp.int32)
    F = C * W * H
    x_flat = x.reshape(B * P, D, F)
    zs, xs = [], []
    for d in range(D):
        i = int(index[d])
        enc = x_flat[:, d, :] @ We[i].T + be[i]
        rec = enc @ Wd[i].T + bd[i]
        zs.append(enc)
        xs.append(rec)
    z = jnp.stack(zs, axis=1).reshape(B, P, D, -1)
    x_hat = jnp.stack(xs, axis=1).reshape(B, P, D, C, W, H)
    return z, x_hat


if __name__ == "__main__":
    key = jax.random.PRNGKey(0)
    k_x, k_x2, k_p = jax.random.split(key, 3)

    # Small shapes consistent with the module: batch=2, patches=4, domains=3,
    # colour channels=3, patch width=height=8 -> in_features = 192, latent = 32.
    B, P, D, C, W, H = 2, 4, 3, 3, 8, 8
    LATENT = 32
    F = C * W * H

    x = jax.random.normal(k_x, (B, P, D, C, W, H), dtype=jnp.float32)
    params = init_params(num_channels=D, in_features=F, latent_size=LATENT, key=k_p)

    # ---- f32 path (module-faithful dtype), default routing ------------------
    routed = prepare_routed_params(params, D)
    z, x_hat = mcae_forward(x, routed)
    jax.block_until_ready((z, x_hat))
    assert z.shape == (B, P, D, LATENT), z.shape
    assert x_hat.shape == (B, P, D, C, W, H), x_hat.shape

    z_ref, xhat_ref = _reference_forward(x, params)
    np.testing.assert_allclose(np.asarray(z), np.asarray(z_ref), rtol=1e-5, atol=1e-5)
    np.testing.assert_allclose(np.asarray(x_hat), np.asarray(xhat_ref), rtol=1e-5, atol=1e-5)

    # ---- explicit `index` routing path ---------------------------------------
    idx = jnp.array([2, 0, 1], dtype=jnp.int32)
    z2, xh2 = multi_channel_autoencoder_forward(x, params, index=idx)
    jax.block_until_ready((z2, xh2))
    z2_ref, xh2_ref = _reference_forward(x, params, index=idx)
    np.testing.assert_allclose(np.asarray(z2), np.asarray(z2_ref), rtol=1e-5, atol=1e-5)
    np.testing.assert_allclose(np.asarray(xh2), np.asarray(xh2_ref), rtol=1e-5, atol=1e-5)

    # ---- multi-step grid + partial last tile (exercises the >=2-step split) --
    B3, P3 = 3, 8                                    # BP = 24 -> 2 grid steps
    x3 = jax.random.normal(k_x2, (B3, P3, D, C, W, H), dtype=jnp.float32)
    z4, xh4 = mcae_forward(x3, routed)
    jax.block_until_ready((z4, xh4))
    z4_ref, xh4_ref = _reference_forward(x3, params)
    np.testing.assert_allclose(np.asarray(z4), np.asarray(z4_ref), rtol=1e-5, atol=1e-5)
    np.testing.assert_allclose(np.asarray(xh4), np.asarray(xh4_ref), rtol=1e-5, atol=1e-5)

    # ---- bf16 I/O fast path (halves HBM bytes; f32 accumulation inside) ------
    routed_bf16 = prepare_routed_params(params, D, compute_dtype=jnp.bfloat16)
    z3, xh3 = mcae_forward(x.astype(jnp.bfloat16), routed_bf16)
    jax.block_until_ready((z3, xh3))
    np.testing.assert_allclose(np.asarray(z3.astype(jnp.float32)), np.asarray(z_ref),
                               rtol=8e-2, atol=8e-2)
    np.testing.assert_allclose(np.asarray(xh3.astype(jnp.float32)), np.asarray(xhat_ref),
                               rtol=8e-2, atol=8e-2)

    print("KERNEL_OK")
</pallas_src>

<mosaic_0001>
module attributes {stable_mosaic.version = 11 : i64} {
  func.func @_mcae_kernel(%arg0: i32, %arg1: memref<8x576xf32, #tpu.memory_space<vmem>>, %arg2: memref<576x96xf32, #tpu.memory_space<vmem>>, %arg3: memref<1x96xf32, #tpu.memory_space<vmem>>, %arg4: memref<96x576xf32, #tpu.memory_space<vmem>>, %arg5: memref<1x576xf32, #tpu.memory_space<vmem>>, %arg6: memref<8x96xf32, #tpu.memory_space<vmem>>, %arg7: memref<8x576xf32, #tpu.memory_space<vmem>>) attributes {dimension_semantics = [#tpu.dimension_semantics<parallel>], iteration_bounds = array<i64: 1>, scalar_prefetch = 0 : i64, scratch_operands = 0 : i64, tpu.core_type = #tpu.core_type<tc>, window_params = [{transform_indices = @transform_0, window_bounds = array<i64: 8, 576>}, {pipeline_mode = #tpu.pipeline_mode<synchronous>, transform_indices = @transform_1, window_bounds = array<i64: 576, 96>}, {pipeline_mode = #tpu.pipeline_mode<synchronous>, transform_indices = @transform_2, window_bounds = array<i64: 1, 96>}, {pipeline_mode = #tpu.pipeline_mode<synchronous>, transform_indices = @transform_3, window_bounds = array<i64: 96, 576>}, {pipeline_mode = #tpu.pipeline_mode<synchronous>, transform_indices = @transform_4, window_bounds = array<i64: 1, 576>}, {transform_indices = @transform_5, window_bounds = array<i64: 8, 96>}, {transform_indices = @transform_6, window_bounds = array<i64: 8, 576>}]} {
    %c0 = arith.constant 0 : index
    %c0_0 = arith.constant 0 : index
    %0 = vector.load %arg1[%c0, %c0_0] : memref<8x576xf32, #tpu.memory_space<vmem>>, vector<8x576xf32>
    %c0_1 = arith.constant 0 : index
    %c0_2 = arith.constant 0 : index
    %1 = vector.load %arg2[%c0_1, %c0_2] : memref<576x96xf32, #tpu.memory_space<vmem>>, vector<576x96xf32>
    %cst = arith.constant dense<0.000000e+00> : vector<8x96xf32>
    %2 = tpu.matmul %0, %1, %cst {dimension_numbers = #tpu.dot_dimension_numbers<[1], [0], [0], [1], [0, 0, 1, 1], [], []>} : vector<8x576xf32>, vector<576x96xf32>, vector<8x96xf32> -> vector<8x96xf32>
    %c0_3 = arith.constant 0 : index
    %c0_4 = arith.constant 0 : index
    %3 = vector.load %arg3[%c0_3, %c0_4] : memref<1x96xf32, #tpu.memory_space<vmem>>, vector<1x96xf32>
    %4 = vector.broadcast %3 : vector<1x96xf32> to vector<8x96xf32>
    %5 = arith.addf %2, %4 : vector<8x96xf32>
    %c0_5 = arith.constant 0 : index
    %c0_6 = arith.constant 0 : index
    %6 = vector.load %arg4[%c0_5, %c0_6] : memref<96x576xf32, #tpu.memory_space<vmem>>, vector<96x576xf32>
    %cst_7 = arith.constant dense<0.000000e+00> : vector<8x576xf32>
    %7 = tpu.matmul %5, %6, %cst_7 {dimension_numbers = #tpu.dot_dimension_numbers<[1], [0], [0], [1], [0, 0, 1, 1], [], []>} : vector<8x96xf32>, vector<96x576xf32>, vector<8x576xf32> -> vector<8x576xf32>
    %c0_8 = arith.constant 0 : index
    %c0_9 = arith.constant 0 : index
    %8 = vector.load %arg5[%c0_8, %c0_9] : memref<1x576xf32, #tpu.memory_space<vmem>>, vector<1x576xf32>
    %9 = vector.broadcast %8 : vector<1x576xf32> to vector<8x576xf32>
    %10 = arith.addf %7, %9 : vector<8x576xf32>
    %c0_10 = arith.constant 0 : index
    %c0_11 = arith.constant 0 : index
    %11 = vector.load %arg6[%c0_10, %c0_11] : memref<8x96xf32, #tpu.memory_space<vmem>>, vector<8x96xf32>
    tpu.vector_store %arg6[%c0_10, %c0_11], %5 {strides = array<i32>} : memref<8x96xf32, #tpu.memory_space<vmem>>, vector<8x96xf32>,
    %c0_12 = arith.constant 0 : index
    %c0_13 = arith.constant 0 : index
    %12 = vector.load %arg7[%c0_12, %c0_13] : memref<8x576xf32, #tpu.memory_space<vmem>>, vector<8x576xf32>
    tpu.vector_store %arg7[%c0_12, %c0_13], %10 {strides = array<i32>} : memref<8x576xf32, #tpu.memory_space<vmem>>, vector<8x576xf32>,
    return
  }
  func.func @transform_0(%arg0: i32) -> (i32, i32) {
    %c0_i32 = arith.constant 0 : i32
    %c0_i32_0 = arith.constant 0 : i32
    return %arg0, %c0_i32 : i32, i32
  }
  func.func @transform_1(%arg0: i32) -> (i32, i32) {
    %c0_i32 = arith.constant 0 : i32
    %c0_i32_0 = arith.constant 0 : i32
    %c0_i32_1 = arith.constant 0 : i32
    return %c0_i32, %c0_i32_0 : i32, i32
  }
  func.func @transform_2(%arg0: i32) -> (i32, i32) {
    %c0_i32 = arith.constant 0 : i32
    %c0_i32_0 = arith.constant 0 : i32
    %c0_i32_1 = arith.constant 0 : i32
    return %c0_i32, %c0_i32_0 : i32, i32
  }
  func.func @transform_3(%arg0: i32) -> (i32, i32) {
    %c0_i32 = arith.constant 0 : i32
    %c0_i32_0 = arith.constant 0 : i32
    %c0_i32_1 = arith.constant 0 : i32
    return %c0_i32, %c0_i32_0 : i32, i32
  }
  func.func @transform_4(%arg0: i32) -> (i32, i32) {
    %c0_i32 = arith.constant 0 : i32
    %c0_i32_0 = arith.constant 0 : i32
    %c0_i32_1 = arith.constant 0 : i32
    return %c0_i32, %c0_i32_0 : i32, i32
  }
  func.func @transform_5(%arg0: i32) -> (i32, i32) {
    %c0_i32 = arith.constant 0 : i32
    %c0_i32_0 = arith.constant 0 : i32
    return %arg0, %c0_i32 : i32, i32
  }
  func.func @transform_6(%arg0: i32) -> (i32, i32) {
    %c0_i32 = arith.constant 0 : i32
    %c0_i32_0 = arith.constant 0 : i32
    return %arg0, %c0_i32 : i32, i32
  }
}

</mosaic_0001>

<llo_original>
// kernel: _forward_impl.1
$region0: #{_forward_impl.1}
  #allocation0 [shape = 'u32[]', space=smem, size = 0x4, offset = 0x4, fixed_abs, tag = 'smem constant byte address 0x4 - core index']
  #allocation1 [shape = 'u32[144,128]{1,0:T(1,128)}', space=vmem, size = 0x12000, scoped, tag = 'internal scratch']
  %s0 = inlined_call_operand.vmem [shape: f32[8,576], index: 0, kind: input, shape index: {}]
  %s1 = inlined_call_operand.vmem [shape: f32[576,96], index: 1, kind: input, shape index: {}]
  %s2 = inlined_call_operand.vmem [shape: f32[1,96], index: 2, kind: input, shape index: {}]
  %s3 = inlined_call_operand.vmem [shape: f32[96,576], index: 3, kind: input, shape index: {}]
  %s4 = inlined_call_operand.vmem [shape: f32[1,576], index: 4, kind: input, shape index: {}]
  %s5 = inlined_call_operand.vmem [shape: f32[8,96], index: 5, kind: output, shape index: {0}]
  %s6 = inlined_call_operand.vmem [shape: f32[8,576], index: 6, kind: output, shape index: {1}]
  %7 = xla_tuple %s5, %s6
  %s8 = sld [smem:[#allocation0]]
  $region38: #{_forward_impl.1} parent=0
    _
  %s10 = ssub.s32 1, %s8
  %s11 = scalar_select 0, %s10, %s8
  // Predicated region
  $region2: #{_forward_impl.1} parent=0 // pred_check
    _
  $region3: #{_forward_impl.1} parent=0 // pred_check_branch
    %13 = sbr.rel (0) target = $region5
  $region4: #{_forward_impl.1} parent=0 // pred_region
    _
  $region5: #{_forward_impl.1} parent=0 // pred_fallthru
    _
  // Predicated region
  $region6: #{_forward_impl.1} parent=0 // pred_check
    _
  $region7: #{_forward_impl.1} parent=0 // pred_check_branch
    %15 = sbr.rel (0) target = $region9
  $region8: #{_forward_impl.1} parent=0 // pred_region
    _
  $region9: #{_forward_impl.1} parent=0 // pred_fallthru
    _
  // Predicated region
  $region10: #{_forward_impl.1} parent=0 // pred_check
    _
  $region11: #{_forward_impl.1} parent=0 // pred_check_branch
    %17 = sbr.rel (0) target = $region13
  $region12: #{_forward_impl.1} parent=0 // pred_region
    _
  $region13: #{_forward_impl.1} parent=0 // pred_fallthru
    _
  // Predicated region
  $region14: #{_forward_impl.1} parent=0 // pred_check
    _
  $region15: #{_forward_impl.1} parent=0 // pred_check_branch
    %19 = sbr.rel (0) target = $region17
  $region16: #{_forward_impl.1} parent=0 // pred_region
    _
  $region17: #{_forward_impl.1} parent=0 // pred_fallthru
    _
  // Predicated region
  $region18: #{_forward_impl.1} parent=0 // pred_check
    _
  $region19: #{_forward_impl.1} parent=0 // pred_check_branch
    %21 = sbr.rel (0) target = $region21
  $region20: #{_forward_impl.1} parent=0 // pred_region
    _
  $region21: #{_forward_impl.1} parent=0 // pred_fallthru
    _
  %v22 = vld [vmem:[%s0] sm:$0xff]
  %v23 = vld [vmem:[%s0 + $0x8] sm:$0xff]
  %v24 = vld [vmem:[%s0 + $0x10] sm:$0xff]
  %v25 = vld [vmem:[%s0 + $0x18] sm:$0xff]
  %v26 = vld [vmem:[%s0 + $0x20] sm:$0xff]
  %v27 = vld [vmem:[%s1] sm:$0xff]
  %v28 = vld [vmem:[%s1 + $0x8] sm:$0xff]
  %v29 = vld [vmem:[%s1 + $0x10] sm:$0xff]
  %v30 = vld [vmem:[%s1 + $0x18] sm:$0xff]
  %v31 = vld [vmem:[%s1 + $0x20] sm:$0xff]
  %v32 = vld [vmem:[%s1 + $0x28] sm:$0xff]
  %v33 = vld [vmem:[%s1 + $0x30] sm:$0xff]
  %v34 = vld [vmem:[%s1 + $0x38] sm:$0xff]
  %v35 = vld [vmem:[%s1 + $0x40] sm:$0xff]
  %v36 = vld [vmem:[%s1 + $0x48] sm:$0xff]
  %v37 = vld [vmem:[%s1 + $0x50] sm:$0xff]
  %v38 = vld [vmem:[%s1 + $0x58] sm:$0xff]
  %v39 = vld [vmem:[%s1 + $0x60] sm:$0xff]
  %v40 = vld [vmem:[%s1 + $0x68] sm:$0xff]
  %v41 = vld [vmem:[%s1 + $0x70] sm:$0xff]
  %v42 = vld [vmem:[%s1 + $0x78] sm:$0xff]
  %v43 = vld [vmem:[%s1 + $0x80] sm:$0xff]
  %v44 = vld [vmem:[%s1 + $0x88] sm:$0xff]
  %v45 = vld [vmem:[%s1 + $0x90] sm:$0xff]
  %v46 = vld [vmem:[%s1 + $0x98] sm:$0xff]
  %v47 = vld [vmem:[%s1 + $0xa0] sm:$0xff]
  %v48 = vld [vmem:[%s1 + $0xa8] sm:$0xff]
  %v49 = vld [vmem:[%s1 + $0xb0] sm:$0xff]
  %v50 = vld [vmem:[%s1 + $0xb8] sm:$0xff]
  %v51 = vld [vmem:[%s1 + $0xc0] sm:$0xff]
  %v52 = vld [vmem:[%s1 + $0xc8] sm:$0xff]
  %v53 = vld [vmem:[%s1 + $0xd0] sm:$0xff]
  %v54 = vld [vmem:[%s1 + $0xd8] sm:$0xff]
  %v55 = vld [vmem:[%s1 + $0xe0] sm:$0xff]
  %v56 = vld [vmem:[%s1 + $0xe8] sm:$0xff]
  %v57 = vld [vmem:[%s1 + $0xf0] sm:$0xff]
  %v58 = vld [vmem:[%s1 + $0xf8] sm:$0xff]
  %v59 = vld [vmem:[%s1 + $0x100] sm:$0xff]
  %v60 = vld [vmem:[%s1 + $0x108] sm:$0xff]
  %v61 = vld [vmem:[%s1 + $0x110] sm:$0xff]
  %v62 = vld [vmem:[%s1 + $0x118] sm:$0xff]
  %v63 = vld [vmem:[%s1 + $0x120] sm:$0xff]
  %v64 = vld [vmem:[%s1 + $0x128] sm:$0xff]
  %v65 = vld [vmem:[%s1 + $0x130] sm:$0xff]
  %v66 = vld [vmem:[%s1 + $0x138] sm:$0xff]
  %v67 = vld [vmem:[%s1 + $0x140] sm:$0xff]
  %v68 = vld [vmem:[%s1 + $0x148] sm:$0xff]
  %v69 = vld [vmem:[%s1 + $0x150] sm:$0xff]
  %v70 = vld [vmem:[%s1 + $0x158] sm:$0xff]
  %v71 = vld [vmem:[%s1 + $0x160] sm:$0xff]
  %v72 = vld [vmem:[%s1 + $0x168] sm:$0xff]
  %v73 = vld [vmem:[%s1 + $0x170] sm:$0xff]
  %v74 = vld [vmem:[%s1 + $0x178] sm:$0xff]
  %v75 = vld [vmem:[%s1 + $0x180] sm:$0xff]
  %v76 = vld [vmem:[%s1 + $0x188] sm:$0xff]
  %v77 = vld [vmem:[%s1 + $0x190] sm:$0xff]
  %v78 = vld [vmem:[%s1 + $0x198] sm:$0xff]
  %v79 = vld [vmem:[%s1 + $0x1a0] sm:$0xff]
  %v80 = vld [vmem:[%s1 + $0x1a8] sm:$0xff]
  %v81 = vld [vmem:[%s1 + $0x1b0] sm:$0xff]
  %v82 = vld [vmem:[%s1 + $0x1b8] sm:$0xff]
  %v83 = vld [vmem:[%s1 + $0x1c0] sm:$0xff]
  %v84 = vld [vmem:[%s1 + $0x1c8] sm:$0xff]
  %v85 = vld [vmem:[%s1 + $0x1d0] sm:$0xff]
  %v86 = vld [vmem:[%s1 + $0x1d8] sm:$0xff]
  %v87 = vld [vmem:[%s1 + $0x1e0] sm:$0xff]
  %v88 = vld [vmem:[%s1 + $0x1e8] sm:$0xff]
  %v89 = vld [vmem:[%s1 + $0x1f0] sm:$0xff]
  %v90 = vld [vmem:[%s1 + $0x1f8] sm:$0xff]
  %v91 = vld [vmem:[%s1 + $0x200] sm:$0xff]
  %v92 = vld [vmem:[%s1 + $0x208] sm:$0xff]
  %v93 = vld [vmem:[%s1 + $0x210] sm:$0xff]
  %v94 = vld [vmem:[%s1 + $0x218] sm:$0xff]
  %v95 = vld [vmem:[%s1 + $0x220] sm:$0xff]
  %v96 = vld [vmem:[%s1 + $0x228] sm:$0xff]
  %v97 = vld [vmem:[%s1 + $0x230] sm:$0xff]
  %v98 = vld [vmem:[%s1 + $0x238] sm:$0xff]
  %v99 = vld [vmem:[%s2] sm:$0x1]
  %v101 = vlaneseq
  %v102 = vshrl.u32 %v101, 7
  %v103 = vsub.s32 0, %v102
  %v104 = vrot.slane %v99, %v103
  %vm106 = vcmask 523264
  %v108 = vsel %vm106, %v26, 0
  %110 = vmatprep.subr.mxu0 0.0
  %111 = vmatpush1.msra.mxu0 %v27
  %112 = vmatprep.subr.mxu0 0.0
  %113 = vmatpush1.msra.mxu0 %v28
  %114 = vmatprep.subr.mxu0 0.0
  %115 = vmatpush1.msra.mxu0 %v29
  %116 = vmatprep.subr.mxu0 0.0
  %117 = vmatpush1.msra.mxu0 %v30
  %118 = vmatprep.subr.mxu0 0.0
  %119 = vmatpush1.msra.mxu0 %v31
  %120 = vmatprep.subr.mxu0 0.0
  %121 = vmatpush1.msra.mxu0 %v32
  %122 = vmatprep.subr.mxu0 0.0
  %123 = vmatpush1.msra.mxu0 %v33
  %124 = vmatprep.subr.mxu0 0.0
  %125 = vmatpush1.msra.mxu0 %v34
  %126 = vmatprep.subr.mxu0 0.0
  %127 = vmatpush1.msra.mxu0 %v35
  %128 = vmatprep.subr.mxu0 0.0
  %129 = vmatpush1.msra.mxu0 %v36
  %130 = vmatprep.subr.mxu0 0.0
  %131 = vmatpush1.msra.mxu0 %v37
  %132 = vmatprep.subr.mxu0 0.0
  %133 = vmatpush1.msra.mxu0 %v38
  %134 = vmatprep.subr.mxu0 0.0
  %135 = vmatpush1.msra.mxu0 %v39
  %136 = vmatprep.subr.mxu0 0.0
  %137 = vmatpush1.msra.mxu0 %v40
  %138 = vmatprep.subr.mxu0 0.0
  %139 = vmatpush1.msra.mxu0 %v41
  %140 = vmatprep.subr.mxu0 0.0
  %141 = vmatpush1.msra.mxu0 %v42
  %142 = vmatprep.subr.mxu0 0.0
  %143 = vmatpush1.msra.mxu0 %v43
  %144 = vmatprep.subr.mxu0 0.0
  %145 = vmatpush1.msra.mxu0 %v44
  %146 = vmatprep.subr.mxu0 0.0
  %147 = vmatpush1.msra.mxu0 %v45
  %148 = vmatprep.subr.mxu0 0.0
  %149 = vmatpush1.msra.mxu0 %v46
  %150 = vmatprep.subr.mxu0 0.0
  %151 = vmatpush1.msra.mxu0 %v47
  %152 = vmatprep.subr.mxu0 0.0
  %153 = vmatpush1.msra.mxu0 %v48
  %154 = vmatprep.subr.mxu0 0.0
  %155 = vmatpush1.msra.mxu0 %v49
  %156 = vmatprep.subr.mxu0 0.0
  %157 = vmatpush1.msra.mxu0 %v50
  %158 = vmatprep.subr.mxu0 0.0
  %159 = vmatpush1.msra.mxu0 %v51
  %160 = vmatprep.subr.mxu0 0.0
  %161 = vmatpush1.msra.mxu0 %v52
  %162 = vmatprep.subr.mxu0 0.0
  %163 = vmatpush1.msra.mxu0 %v53
  %164 = vmatprep.subr.mxu0 0.0
  %165 = vmatpush1.msra.mxu0 %v54
  %166 = vmatprep.subr.mxu0 0.0
  %167 = vmatpush1.msra.mxu0 %v55
  %168 = vmatprep.subr.mxu0 0.0
  %169 = vmatpush1.msra.mxu0 %v56
  %170 = vmatprep.subr.mxu0 0.0
  %171 = vmatpush1.msra.mxu0 %v57
  %172 = vmatprep.subr.mxu0 0.0
  %173 = vmatpush1.msra.mxu0 %v58
  %174 = vmatprep.mubr.f32.mxu0 %v23
  %175 = vmatmul.mubr.f32.gmra.mrb[0].mxu0 %v22
  %v176 = vpop.f32.mrb[0].mxu0
  %v177 = vadd.f32 %v104, %v176
  %v178 = vpop.f32.mrb[0].mxu0
  %179 = vdwg.mxu0
  %180 = vmatprep.subr.mxu0 0.0
  %181 = vmatpush1.msra.mxu0 %v59
  %182 = vmatprep.subr.mxu0 0.0
  %183 = vmatpush1.msra.mxu0 %v60
  %184 = vmatprep.subr.mxu0 0.0
  %185 = vmatpush1.msra.mxu0 %v61
  %186 = vmatprep.subr.mxu0 0.0
  %187 = vmatpush1.msra.mxu0 %v62
  %188 = vmatprep.subr.mxu0 0.0
  %189 = vmatpush1.msra.mxu0 %v63
  %190 = vmatprep.subr.mxu0 0.0
  %191 = vmatpush1.msra.mxu0 %v64
  %192 = vmatprep.subr.mxu0 0.0
  %193 = vmatpush1.msra.mxu0 %v65
  %194 = vmatprep.subr.mxu0 0.0
  %195 = vmatpush1.msra.mxu0 %v66
  %196 = vmatprep.subr.mxu0 0.0
  %197 = vmatpush1.msra.mxu0 %v67
  %198 = vmatprep.subr.mxu0 0.0
  %199 = vmatpush1.msra.mxu0 %v68
  %200 = vmatprep.subr.mxu0 0.0
  %201 = vmatpush1.msra.mxu0 %v69
  %202 = vmatprep.subr.mxu0 0.0
  %203 = vmatpush1.msra.mxu0 %v70
  %204 = vmatprep.subr.mxu0 0.0
  %205 = vmatpush1.msra.mxu0 %v71
  %206 = vmatprep.subr.mxu0 0.0
  %207 = vmatpush1.msra.mxu0 %v72
  %208 = vmatprep.subr.mxu0 0.0
  %209 = vmatpush1.msra.mxu0 %v73
  %210 = vmatprep.subr.mxu0 0.0
  %211 = vmatpush1.msra.mxu0 %v74
  %212 = vmatprep.subr.mxu0 0.0
  %213 = vmatpush1.msra.mxu0 %v75
  %214 = vmatprep.subr.mxu0 0.0
  %215 = vmatpush1.msra.mxu0 %v76
  %216 = vmatprep.subr.mxu0 0.0
  %217 = vmatpush1.msra.mxu0 %v77
  %218 = vmatprep.subr.mxu0 0.0
  %219 = vmatpush1.msra.mxu0 %v78
  %220 = vmatprep.subr.mxu0 0.0
  %221 = vmatpush1.msra.mxu0 %v79
  %222 = vmatprep.subr.mxu0 0.0
  %223 = vmatpush1.msra.mxu0 %v80
  %224 = vmatprep.subr.mxu0 0.0
  %225 = vmatpush1.msra.mxu0 %v81
  %226 = vmatprep.subr.mxu0 0.0
  %227 = vmatpush1.msra.mxu0 %v82
  %228 = vmatprep.subr.mxu0 0.0
  %229 = vmatpush1.msra.mxu0 %v83
  %230 = vmatprep.subr.mxu0 0.0
  %231 = vmatpush1.msra.mxu0 %v84
  %232 = vmatprep.subr.mxu0 0.0
  %233 = vmatpush1.msra.mxu0 %v85
  %234 = vmatprep.subr.mxu0 0.0
  %235 = vmatpush1.msra.mxu0 %v86
  %236 = vmatprep.subr.mxu0 0.0
  %237 = vmatpush1.msra.mxu0 %v87
  %238 = vmatprep.subr.mxu0 0.0
  %239 = vmatpush1.msra.mxu0 %v88
  %240 = vmatprep.subr.mxu0 0.0
  %241 = vmatpush1.msra.mxu0 %v89
  %242 = vmatprep.subr.mxu0 0.0
  %243 = vmatpush1.msra.mxu0 %v90
  %244 = vmatprep.mubr.f32.mxu0 %v25
  %245 = vmatmul.mubr.f32.gmra.mrb[0].mxu0 %v24
  %v246 = vpop.f32.mrb[0].mxu0
  %v247 = vadd.f32 %v177, %v246
  %v248 = vpop.f32.mrb[0].mxu0
  %249 = vdwg.mxu0
  %250 = vmatprep.subr.mxu0 0.0
  %251 = vmatpush1.msra.mxu0 %v91
  %252 = vmatprep.subr.mxu0 0.0
  %253 = vmatpush1.msra.mxu0 %v92
  %254 = vmatprep.subr.mxu0 0.0
  %255 = vmatpush1.msra.mxu0 %v93
  %256 = vmatprep.subr.mxu0 0.0
  %257 = vmatpush1.msra.mxu0 %v94
  %258 = vmatprep.subr.mxu0 0.0
  %259 = vmatpush1.msra.mxu0 %v95
  %260 = vmatprep.subr.mxu0 0.0
  %261 = vmatpush1.msra.mxu0 %v96
  %262 = vmatprep.subr.mxu0 0.0
  %263 = vmatpush1.msra.mxu0 %v97
  %264 = vmatprep.subr.mxu0 0.0
  %265 = vmatpush1.msra.mxu0 %v98
  %266 = vmatprep.subr.mxu0 0.0
  %267 = vmatpush1.msra.mxu0 0.0
  %268 = vmatprep.subr.mxu0 0.0
  %269 = vmatpush1.msra.mxu0 0.0
  %270 = vmatprep.subr.mxu0 0.0
  %271 = vmatpush1.msra.mxu0 0.0
  %272 = vmatprep.subr.mxu0 0.0
  %273 = vmatpush1.msra.mxu0 0.0
  %274 = vmatprep.subr.mxu0 0.0
  %275 = vmatpush1.msra.mxu0 0.0
  %276 = vmatprep.subr.mxu0 0.0
  %277 = vmatpush1.msra.mxu0 0.0
  %278 = vmatprep.subr.mxu0 0.0
  %279 = vmatpush1.msra.mxu0 0.0
  %280 = vmatprep.subr.mxu0 0.0
  %281 = vmatpush1.msra.mxu0 0.0
  %282 = vmatprep.subr.mxu0 0.0
  %283 = vmatpush1.msra.mxu0 0.0
  %284 = vmatprep.subr.mxu0 0.0
  %285 = vmatpush1.msra.mxu0 0.0
  %286 = vmatprep.subr.mxu0 0.0
  %287 = vmatpush1.msra.mxu0 0.0
  %288 = vmatprep.subr.mxu0 0.0
  %289 = vmatpush1.msra.mxu0 0.0
  %290 = vmatprep.subr.mxu0 0.0
  %291 = vmatpush1.msra.mxu0 0.0
  %292 = vmatprep.subr.mxu0 0.0
  %293 = vmatpush1.msra.mxu0 0.0
  %294 = vmatprep.subr.mxu0 0.0
  %295 = vmatpush1.msra.mxu0 0.0
  %296 = vmatprep.subr.mxu0 0.0
  %297 = vmatpush1.msra.mxu0 0.0
  %298 = vmatprep.subr.mxu0 0.0
  %299 = vmatpush1.msra.mxu0 0.0
  %300 = vmatprep.subr.mxu0 0.0
  %301 = vmatpush1.msra.mxu0 0.0
  %302 = vmatprep.subr.mxu0 0.0
  %303 = vmatpush1.msra.mxu0 0.0
  %304 = vmatprep.subr.mxu0 0.0
  %305 = vmatpush1.msra.mxu0 0.0
  %306 = vmatprep.subr.mxu0 0.0
  %307 = vmatpush1.msra.mxu0 0.0
  %308 = vmatprep.subr.mxu0 0.0
  %309 = vmatpush1.msra.mxu0 0.0
  %310 = vmatprep.subr.mxu0 0.0
  %311 = vmatpush1.msra.mxu0 0.0
  %312 = vmatprep.subr.mxu0 0.0
  %313 = vmatpush1.msra.mxu0 0.0
  %314 = vmatprep.mubr.f32.mxu0 0.0
  %315 = vmatmul.mubr.f32.gmra.mrb[0].mxu0 %v108
  %v316 = vpop.f32.mrb[0].mxu0
  %v317 = vadd.f32 %v247, %v316
  %v318 = vpop.f32.mrb[0].mxu0
  %319 = vdwg.mxu0
  %v320 = vld [vmem:[%s3] sm:$0xff]
  %v321 = vld [vmem:[%s3 + $0x8] sm:$0xff]
  %v322 = vld [vmem:[%s3 + $0x10] sm:$0xff]
  %v323 = vld [vmem:[%s3 + $0x18] sm:$0xff]
  %v324 = vld [vmem:[%s3 + $0x20] sm:$0xff]
  %v325 = vld [vmem:[%s3 + $0x28] sm:$0xff]
  %v326 = vld [vmem:[%s3 + $0x30] sm:$0xff]
  %v327 = vld [vmem:[%s3 + $0x38] sm:$0xff]
  %v328 = vld [vmem:[%s3 + $0x40] sm:$0xff]
  %v329 = vld [vmem:[%s3 + $0x48] sm:$0xff]
  %v330 = vld [vmem:[%s3 + $0x50] sm:$0xff]
  %v331 = vld [vmem:[%s3 + $0x58] sm:$0xff]
  %v332 = vld [vmem:[%s3 + $0x60] sm:$0xff]
  %v333 = vld [vmem:[%s3 + $0x68] sm:$0xff]
  %v334 = vld [vmem:[%s3 + $0x70] sm:$0xff]
  %v335 = vld [vmem:[%s3 + $0x78] sm:$0xff]
  %v336 = vld [vmem:[%s3 + $0x80] sm:$0xff]
  %v337 = vld [vmem:[%s3 + $0x88] sm:$0xff]
  %v338 = vld [vmem:[%s3 + $0x90] sm:$0xff]
  %v339 = vld [vmem:[%s3 + $0x98] sm:$0xff]
  %v340 = vld [vmem:[%s3 + $0xa0] sm:$0xff]
  %v341 = vld [vmem:[%s3 + $0xa8] sm:$0xff]
  %v342 = vld [vmem:[%s3 + $0xb0] sm:$0xff]
  %v343 = vld [vmem:[%s3 + $0xb8] sm:$0xff]
  %v344 = vld [vmem:[%s3 + $0xc0] sm:$0xff]
  %v345 = vld [vmem:[%s3 + $0xc8] sm:$0xff]
  %v346 = vld [vmem:[%s3 + $0xd0] sm:$0xff]
  %v347 = vld [vmem:[%s3 + $0xd8] sm:$0xff]
  %v348 = vld [vmem:[%s3 + $0xe0] sm:$0xff]
  %v349 = vld [vmem:[%s3 + $0xe8] sm:$0xff]
  %v350 = vld [vmem:[%s3 + $0xf0] sm:$0xff]
  %v351 = vld [vmem:[%s3 + $0xf8] sm:$0xff]
  %v352 = vld [vmem:[%s3 + $0x100] sm:$0xff]
  %v353 = vld [vmem:[%s3 + $0x108] sm:$0xff]
  %v354 = vld [vmem:[%s3 + $0x110] sm:$0xff]
  %v355 = vld [vmem:[%s3 + $0x118] sm:$0xff]
  %v356 = vld [vmem:[%s3 + $0x120] sm:$0xff]
  %v357 = vld [vmem:[%s3 + $0x128] sm:$0xff]
  %v358 = vld [vmem:[%s3 + $0x130] sm:$0xff]
  %v359 = vld [vmem:[%s3 + $0x138] sm:$0xff]
  %v360 = vld [vmem:[%s3 + $0x140] sm:$0xff]
  %v361 = vld [vmem:[%s3 + $0x148] sm:$0xff]
  %v362 = vld [vmem:[%s3 + $0x150] sm:$0xff]
  %v363 = vld [vmem:[%s3 + $0x158] sm:$0xff]
  %v364 = vld [vmem:[%s3 + $0x160] sm:$0xff]
  %v365 = vld [vmem:[%s3 + $0x168] sm:$0xff]
  %v366 = vld [vmem:[%s3 + $0x170] sm:$0xff]
  %v367 = vld [vmem:[%s3 + $0x178] sm:$0xff]
  %v368 = vld [vmem:[%s3 + $0x180] sm:$0xff]
  %v369 = vld [vmem:[%s3 + $0x188] sm:$0xff]
  %v370 = vld [vmem:[%s3 + $0x190] sm:$0xff]
  %v371 = vld [vmem:[%s3 + $0x198] sm:$0xff]
  %v372 = vld [vmem:[%s3 + $0x1a0] sm:$0xff]
  %v373 = vld [vmem:[%s3 + $0x1a8] sm:$0xff]
  %v374 = vld [vmem:[%s3 + $0x1b0] sm:$0xff]
  %v375 = vld [vmem:[%s3 + $0x1b8] sm:$0xff]
  %v376 = vld [vmem:[%s3 + $0x1c0] sm:$0xff]
  %v377 = vld [vmem:[%s3 + $0x1c8] sm:$0xff]
  %v378 = vld [vmem:[%s3 + $0x1d0] sm:$0xff]
  %v379 = vld [vmem:[%s3 + $0x1d8] sm:$0xff]
  %v380 = vld [vmem:[%s4] sm:$0x1f]
  %v382 = vlaneseq
  %v383 = vshrl.u32 %v382, 7
  %v384 = vsub.s32 0, %v383
  %v385 = vrot.slane %v380, %v384
  %v386 = vlaneseq
  %v387 = vshrl.u32 %v386, 7
  %v388 = vsub.s32 1, %v387
  %v389 = vrot.slane %v380, %v388
  %v390 = vlaneseq
  %v391 = vshrl.u32 %v390, 7
  %v392 = vsub.s32 2, %v391
  %v393 = vrot.slane %v380, %v392
  %v394 = vlaneseq
  %v395 = vshrl.u32 %v394, 7
  %v396 = vsub.s32 3, %v395
  %v397 = vrot.slane %v380, %v396
  %v398 = vlaneseq
  %v399 = vshrl.u32 %v398, 7
  %v400 = vsub.s32 4, %v399
  %v401 = vrot.slane %v380, %v400
  %vm407 = vcmask 785408
  %v409 = vsel %vm407, %v317, 0
  %411 = vmatprep.subr.mxu0 %v321
  %412 = vmatpush1.msra.mxu0 %v320
  %413 = vmatprep.subr.mxu0 %v326
  %414 = vmatpush1.msra.mxu0 %v325
  %415 = vmatprep.subr.mxu0 %v331
  %416 = vmatpush1.msra.mxu0 %v330
  %417 = vmatprep.subr.mxu0 %v336
  %418 = vmatpush1.msra.mxu0 %v335
  %419 = vmatprep.subr.mxu0 %v341
  %420 = vmatpush1.msra.mxu0 %v340
  %421 = vmatprep.subr.mxu0 %v346
  %422 = vmatpush1.msra.mxu0 %v345
  %423 = vmatprep.subr.mxu0 %v351
  %424 = vmatpush1.msra.mxu0 %v350
  %425 = vmatprep.subr.mxu0 %v356
  %426 = vmatpush1.msra.mxu0 %v355
  %427 = vmatprep.subr.mxu0 %v361
  %428 = vmatpush1.msra.mxu0 %v360
  %429 = vmatprep.subr.mxu0 %v366
  %430 = vmatpush1.msra.mxu0 %v365
  %431 = vmatprep.subr.mxu0 %v371
  %432 = vmatpush1.msra.mxu0 %v370
  %433 = vmatprep.subr.mxu0 %v376
  %434 = vmatpush1.msra.mxu0 %v375
  %435 = vmatprep.subr.mxu0 0.0
  %436 = vmatpush1.msra.mxu0 0.0
  %437 = vmatprep.subr.mxu0 0.0
  %438 = vmatpush1.msra.mxu0 0.0
  %439 = vmatprep.subr.mxu0 0.0
  %440 = vmatpush1.msra.mxu0 0.0
  %441 = vmatprep.subr.mxu0 0.0
  %442 = vmatpush1.msra.mxu0 0.0
  %443 = vmatprep.subr.mxu0 0.0
  %444 = vmatpush1.msra.mxu0 0.0
  %445 = vmatprep.subr.mxu0 0.0
  %446 = vmatpush1.msra.mxu0 0.0
  %447 = vmatprep.subr.mxu0 0.0
  %448 = vmatpush1.msra.mxu0 0.0
  %449 = vmatprep.subr.mxu0 0.0
  %450 = vmatpush1.msra.mxu0 0.0
  %451 = vmatprep.subr.mxu0 0.0
  %452 = vmatpush1.msra.mxu0 0.0
  %453 = vmatprep.subr.mxu0 0.0
  %454 = vmatpush1.msra.mxu0 0.0
  %455 = vmatprep.subr.mxu0 0.0
  %456 = vmatpush1.msra.mxu0 0.0
  %457 = vmatprep.subr.mxu0 0.0
  %458 = vmatpush1.msra.mxu0 0.0
  %459 = vmatprep.subr.mxu0 0.0
  %460 = vmatpush1.msra.mxu0 0.0
  %461 = vmatprep.subr.mxu0 0.0
  %462 = vmatpush1.msra.mxu0 0.0
  %463 = vmatprep.subr.mxu0 0.0
  %464 = vmatpush1.msra.mxu0 0.0
  %465 = vmatprep.subr.mxu0 0.0
  %466 = vmatpush1.msra.mxu0 0.0
  %467 = vmatprep.subr.mxu0 0.0
  %468 = vmatpush1.msra.mxu0 0.0
  %469 = vmatprep.subr.mxu0 0.0
  %470 = vmatpush1.msra.mxu0 0.0
  %471 = vmatprep.subr.mxu0 0.0
  %472 = vmatpush1.msra.mxu0 0.0
  %473 = vmatprep.subr.mxu0 0.0
  %474 = vmatpush1.msra.mxu0 0.0
  %475 = vmatprep.mubr.f32.mxu0 0.0
  %476 = vmatmul.mubr.f32.gmra.mrb[0].mxu0 %v409
  %v477 = vpop.f32.mrb[0].mxu0
  %v478 = vadd.f32 %v385, %v477
  %v479 = vpop.f32.mrb[0].mxu0
  %v480 = vadd.f32 %v389, %v479
  %481 = vdwg.mxu0
  %482 = vmatprep.subr.mxu0 %v323
  %483 = vmatpush1.msra.mxu0 %v322
  %484 = vmatprep.subr.mxu0 %v328
  %485 = vmatpush1.msra.mxu0 %v327
  %486 = vmatprep.subr.mxu0 %v333
  %487 = vmatpush1.msra.mxu0 %v332
  %488 = vmatprep.subr.mxu0 %v338
  %489 = vmatpush1.msra.mxu0 %v337
  %490 = vmatprep.subr.mxu0 %v343
  %491 = vmatpush1.msra.mxu0 %v342
  %492 = vmatprep.subr.mxu0 %v348
  %493 = vmatpush1.msra.mxu0 %v347
  %494 = vmatprep.subr.mxu0 %v353
  %495 = vmatpush1.msra.mxu0 %v352
  %496 = vmatprep.subr.mxu0 %v358
  %497 = vmatpush1.msra.mxu0 %v357
  %498 = vmatprep.subr.mxu0 %v363
  %499 = vmatpush1.msra.mxu0 %v362
  %500 = vmatprep.subr.mxu0 %v368
  %501 = vmatpush1.msra.mxu0 %v367
  %502 = vmatprep.subr.mxu0 %v373
  %503 = vmatpush1.msra.mxu0 %v372
  %504 = vmatprep.subr.mxu0 %v378
  %505 = vmatpush1.msra.mxu0 %v377
  %506 = vmatprep.subr.mxu0 0.0
  %507 = vmatpush1.msra.mxu0 0.0
  %508 = vmatprep.subr.mxu0 0.0
  %509 = vmatpush1.msra.mxu0 0.0
  %510 = vmatprep.subr.mxu0 0.0
  %511 = vmatpush1.msra.mxu0 0.0
  %512 = vmatprep.subr.mxu0 0.0
  %513 = vmatpush1.msra.mxu0 0.0
  %514 = vmatprep.subr.mxu0 0.0
  %515 = vmatpush1.msra.mxu0 0.0
  %516 = vmatprep.subr.mxu0 0.0
  %517 = vmatpush1.msra.mxu0 0.0
  %518 = vmatprep.subr.mxu0 0.0
  %519 = vmatpush1.msra.mxu0 0.0
  %520 = vmatprep.subr.mxu0 0.0
  %521 = vmatpush1.msra.mxu0 0.0
  %522 = vmatprep.subr.mxu0 0.0
  %523 = vmatpush1.msra.mxu0 0.0
  %524 = vmatprep.subr.mxu0 0.0
  %525 = vmatpush1.msra.mxu0 0.0
  %526 = vmatprep.subr.mxu0 0.0
  %527 = vmatpush1.msra.mxu0 0.0
  %528 = vmatprep.subr.mxu0 0.0
  %529 = vmatpush1.msra.mxu0 0.0
  %530 = vmatprep.subr.mxu0 0.0
  %531 = vmatpush1.msra.mxu0 0.0
  %532 = vmatprep.subr.mxu0 0.0
  %533 = vmatpush1.msra.mxu0 0.0
  %534 = vmatprep.subr.mxu0 0.0
  %535 = vmatpush1.msra.mxu0 0.0
  %536 = vmatprep.subr.mxu0 0.0
  %537 = vmatpush1.msra.mxu0 0.0
  %538 = vmatprep.subr.mxu0 0.0
  %539 = vmatpush1.msra.mxu0 0.0
  %540 = vmatprep.subr.mxu0 0.0
  %541 = vmatpush1.msra.mxu0 0.0
  %542 = vmatprep.subr.mxu0 0.0
  %543 = vmatpush1.msra.mxu0 0.0
  %544 = vmatprep.subr.mxu0 0.0
  %545 = vmatpush1.msra.mxu0 0.0
  %546 = vmatprep.mubr.f32.mxu0 0.0
  %547 = vmatmul.mubr.f32.gmra.mrb[0].mxu0 %v409
  %v548 = vpop.f32.mrb[0].mxu0
  %v549 = vadd.f32 %v393, %v548
  %v550 = vpop.f32.mrb[0].mxu0
  %v551 = vadd.f32 %v397, %v550
  %552 = vdwg.mxu0
  %553 = vmatprep.subr.mxu0 0.0
  %554 = vmatpush1.msra.mxu0 %v324
  %555 = vmatprep.subr.mxu0 0.0
  %556 = vmatpush1.msra.mxu0 %v329
  %557 = vmatprep.subr.mxu0 0.0
  %558 = vmatpush1.msra.mxu0 %v334
  %559 = vmatprep.subr.mxu0 0.0
  %560 = vmatpush1.msra.mxu0 %v339
  %561 = vmatprep.subr.mxu0 0.0
  %562 = vmatpush1.msra.mxu0 %v344
  %563 = vmatprep.subr.mxu0 0.0
  %564 = vmatpush1.msra.mxu0 %v349
  %565 = vmatprep.subr.mxu0 0.0
  %566 = vmatpush1.msra.mxu0 %v354
  %567 = vmatprep.subr.mxu0 0.0
  %568 = vmatpush1.msra.mxu0 %v359
  %569 = vmatprep.subr.mxu0 0.0
  %570 = vmatpush1.msra.mxu0 %v364
  %571 = vmatprep.subr.mxu0 0.0
  %572 = vmatpush1.msra.mxu0 %v369
  %573 = vmatprep.subr.mxu0 0.0
  %574 = vmatpush1.msra.mxu0 %v374
  %575 = vmatprep.subr.mxu0 0.0
  %576 = vmatpush1.msra.mxu0 %v379
  %577 = vmatprep.subr.mxu0 0.0
  %578 = vmatpush1.msra.mxu0 0.0
  %579 = vmatprep.subr.mxu0 0.0
  %580 = vmatpush1.msra.mxu0 0.0
  %581 = vmatprep.subr.mxu0 0.0
  %582 = vmatpush1.msra.mxu0 0.0
  %583 = vmatprep.subr.mxu0 0.0
  %584 = vmatpush1.msra.mxu0 0.0
  %585 = vmatprep.subr.mxu0 0.0
  %586 = vmatpush1.msra.mxu0 0.0
  %587 = vmatprep.subr.mxu0 0.0
  %588 = vmatpush1.msra.mxu0 0.0
  %589 = vmatprep.subr.mxu0 0.0
  %590 = vmatpush1.msra.mxu0 0.0
  %591 = vmatprep.subr.mxu0 0.0
  %592 = vmatpush1.msra.mxu0 0.0
  %593 = vmatprep.subr.mxu0 0.0
  %594 = vmatpush1.msra.mxu0 0.0
  %595 = vmatprep.subr.mxu0 0.0
  %596 = vmatpush1.msra.mxu0 0.0
  %597 = vmatprep.subr.mxu0 0.0
  %598 = vmatpush1.msra.mxu0 0.0
  %599 = vmatprep.subr.mxu0 0.0
  %600 = vmatpush1.msra.mxu0 0.0
  %601 = vmatprep.subr.mxu0 0.0
  %602 = vmatpush1.msra.mxu0 0.0
  %603 = vmatprep.subr.mxu0 0.0
  %604 = vmatpush1.msra.mxu0 0.0
  %605 = vmatprep.subr.mxu0 0.0
  %606 = vmatpush1.msra.mxu0 0.0
  %607 = vmatprep.subr.mxu0 0.0
  %608 = vmatpush1.msra.mxu0 0.0
  %609 = vmatprep.subr.mxu0 0.0
  %610 = vmatpush1.msra.mxu0 0.0
  %611 = vmatprep.subr.mxu0 0.0
  %612 = vmatpush1.msra.mxu0 0.0
  %613 = vmatprep.subr.mxu0 0.0
  %614 = vmatpush1.msra.mxu0 0.0
  %615 = vmatprep.subr.mxu0 0.0
  %616 = vmatpush1.msra.mxu0 0.0
  %617 = vmatprep.mubr.f32.mxu0 0.0
  %618 = vmatmul.mubr.f32.gmra.mrb[0].mxu0 %v409
  %v619 = vpop.f32.mrb[0].mxu0
  %v620 = vadd.f32 %v401, %v619
  %v621 = vpop.f32.mrb[0].mxu0
  %622 = vdwg.mxu0
  %623 = vst.msk [vmem:[%s5] sm:$0xff] %vm407, %v317
  %624 = vst [vmem:[%s6] sm:$0xff] %v478
  %625 = vst [vmem:[%s6 + $0x8] sm:$0xff] %v480
  %626 = vst [vmem:[%s6 + $0x10] sm:$0xff] %v549
  %627 = vst [vmem:[%s6 + $0x18] sm:$0xff] %v551
  %628 = vst.msk [vmem:[%s6 + $0x20] sm:$0xff] %vm106, %v620
  // Predicated region
  $region22: #{_forward_impl.1} parent=0 // pred_check
    _
  $region23: #{_forward_impl.1} parent=0 // pred_check_branch
    %630 = sbr.rel (0) target = $region25
  $region24: #{_forward_impl.1} parent=0 // pred_region
    _
  $region25: #{_forward_impl.1} parent=0 // pred_fallthru
    _
  // Predicated region
  $region26: #{_forward_impl.1} parent=0 // pred_check
    _
  $region27: #{_forward_impl.1} parent=0 // pred_check_branch
    %632 = sbr.rel (0) target = $region29
  $region28: #{_forward_impl.1} parent=0 // pred_region
    _
  $region29: #{_forward_impl.1} parent=0 // pred_fallthru
    _
  // Predicated region
  $region30: #{_forward_impl.1} parent=0 // pred_check
    _
  $region31: #{_forward_impl.1} parent=0 // pred_check_branch
    %634 = sbr.rel (0) target = $region33
  $region32: #{_forward_impl.1} parent=0 // pred_region
    _
  $region33: #{_forward_impl.1} parent=0 // pred_fallthru
    _
  // Predicated region
  $region34: #{_forward_impl.1} parent=0 // pred_check
    _
  $region35: #{_forward_impl.1} parent=0 // pred_check_branch
    %636 = sbr.rel (0) target = $region37
  $region36: #{_forward_impl.1} parent=0 // pred_region
    _
  $region37: #{_forward_impl.1} parent=0 // pred_fallthru
    _

</llo_original>
